<compile_context>
chip_gen: v6e
topology: v6e:2x2x1
jax: 0.10.0
libtpu: 0.0.40
codegen_flags: <defaults>
</compile_context>

<pallas_src>
import functools

import jax
import jax.numpy as jnp
from jax import lax
from jax.experimental import pallas as pl
from jax.experimental.pallas import tpu as pltpu


# ---------------------------------------------------------------------------
# Pallas kernel: BiasFree LayerNorm on a (TR, C_pad) row tile.
# ---------------------------------------------------------------------------
def _biasfree_ln_kernel(x_ref, w_ref, o_ref, *, eps, c_true):
    x = x_ref[...].astype(jnp.float32)                       # (TR, C_pad)
    c_pad = x.shape[-1]

    if c_pad == c_true:
        # Fast path: no padded lanes, plain stable two-pass stats.
        mu = jnp.mean(x, axis=-1, keepdims=True)              # (TR, 1)
        d = x - mu
        var = jnp.mean(d * d, axis=-1, keepdims=True)         # unbiased=False
    else:
        # Padded lanes (zeros) must not contribute to the statistics.
        lane = lax.broadcasted_iota(jnp.int32, x.shape, dimension=x.ndim - 1)
        valid = lane < c_true
        inv_c = jnp.float32(1.0 / c_true)
        mu = jnp.sum(jnp.where(valid, x, 0.0), axis=-1, keepdims=True) * inv_c
        d = jnp.where(valid, x - mu, 0.0)
        var = jnp.sum(d * d, axis=-1, keepdims=True) * inv_c

    inv = lax.rsqrt(var + eps)                                 # EUP rsqrt
    # out = x / sqrt(var + eps) * weight   (x itself is not mean-centered).
    # Padded weight lanes are zero, so padded output lanes are zero.
    o_ref[...] = (x * inv * w_ref[...]).astype(o_ref.dtype)


# ---------------------------------------------------------------------------
# Tile selection: VMEM-budgeted, dtype-aware, with enough grid steps for
# v7x megacore pipelining when the problem is big enough.
# ---------------------------------------------------------------------------
def _pick_row_tile(rows, c_pad, itemsize):
    # Minimum sublane tile by dtype packing (f32: 8, bf16: 16, int8/fp8: 32).
    if itemsize >= 4:
        min_rows = 8
    elif itemsize == 2:
        min_rows = 16
    else:
        min_rows = 32

    # ~4 MiB per block: big enough for roofline-length DMAs, small enough that
    # (in + out) * 2 double-buffers + f32 compute temps stay far below the
    # 64 MiB v7x VMEM and comfortably inside a bumped scoped limit everywhere.
    budget_bytes = 4 << 20
    candidates = [t for t in (4096, 2048, 1024, 512, 256, 128, 64, 32, 16, 8)
                  if t >= min_rows and t * c_pad * itemsize <= budget_bytes]
    if not candidates:
        candidates = [min_rows]

    # Largest tile that still leaves >= 8 grid steps (>= ~4 steps per TC on
    # v7x so the double-buffer pipeline actually overlaps DMA with compute).
    for t in candidates:
        if pl.cdiv(rows, t) >= 8:
            return t
    # rows too small for 8 steps at any candidate: take the largest tile that
    # does not exceed the row count (single / few steps), else the smallest.
    for t in candidates:
        if t <= rows:
            return t
    return candidates[-1]


# ---------------------------------------------------------------------------
# Wrapper: accepts any x whose last dim == normalized_shape.
# ---------------------------------------------------------------------------
def biasfree_layernorm(x, weight, eps=1e-5):
    C = x.shape[-1]
    assert weight.shape == (C,), "weight must match normalized_shape"
    orig_shape = x.shape

    rows = 1
    for d in x.shape[:-1]:
        rows *= d
    x2 = x.reshape(rows, C)

    # Lane-density guard: pad the normalized dim to a multiple of 128 so every
    # load/store is an unmasked full-lane op and HBM DMAs are lane-dense.
    c_pad = max(128, ((C + 127) // 128) * 128)
    if c_pad != C:
        x2 = jnp.pad(x2, ((0, 0), (0, c_pad - C)))
        w2 = jnp.pad(weight, (0, c_pad - C)).reshape(1, c_pad)
    else:
        w2 = weight.reshape(1, c_pad)

    itemsize = jnp.dtype(x.dtype).itemsize
    tr = _pick_row_tile(rows, c_pad, itemsize)
    grid = (pl.cdiv(rows, tr),)

    # Explicit scoped-VMEM budget: double-buffered in+out blocks plus f32
    # compute temps plus margin.  v5e's default scoped limit is only 16 MiB;
    # cap well under v7x's 64 MiB per TC.
    block_bytes = tr * c_pad * itemsize
    f32_block_bytes = tr * c_pad * 4
    vmem_limit = 4 * block_bytes + 3 * f32_block_bytes + (2 << 20)
    vmem_limit = int(min(max(vmem_limit, 16 << 20), 56 << 20))

    out = pl.pallas_call(
        functools.partial(_biasfree_ln_kernel, eps=eps, c_true=C),
        out_shape=jax.ShapeDtypeStruct((rows, c_pad), x.dtype),
        grid=grid,
        in_specs=[
            pl.BlockSpec((tr, c_pad), lambda i: (i, 0)),   # row tile of x
            pl.BlockSpec((1, c_pad), lambda i: (0, 0)),    # weight, resident
        ],
        out_specs=pl.BlockSpec((tr, c_pad), lambda i: (i, 0)),
        compiler_params=pltpu.CompilerParams(
            dimension_semantics=("parallel",),
            vmem_limit_bytes=vmem_limit),
    )(x2, w2)

    if c_pad != C:
        out = out[:, :C]
    return out.reshape(orig_shape)


# ---------------------------------------------------------------------------
# Pure-JAX reference (matches torch semantics with unbiased=False).
# ---------------------------------------------------------------------------
def reference(x, weight, eps=1e-5):
    sigma = jnp.var(x, axis=-1, keepdims=True)   # ddof=0 == unbiased=False
    return x / jnp.sqrt(sigma + eps) * weight


# ---------------------------------------------------------------------------
if __name__ == "__main__":
    # x: (batch, seq, hidden) = (2, 256, 128); normalized_shape = 128.
    B, N, C = 2, 256, 128

    key = jax.random.PRNGKey(0)
    kx, kw = jax.random.split(key)
    x = jax.random.normal(kx, (B, N, C), jnp.float32)
    weight = 1.0 + 0.1 * jax.random.normal(kw, (C,), jnp.float32)

    out = biasfree_layernorm(x, weight)
    out = jax.block_until_ready(out)

    ref = reference(x, weight)
    assert out.shape == x.shape
    assert jnp.allclose(out, ref, atol=1e-4, rtol=1e-4), \
        "mismatch vs pure-JAX reference"

    print("KERNEL_OK")
</pallas_src>

<mosaic_0001>
module attributes {stable_mosaic.version = 11 : i64} {
  func.func @_biasfree_ln_kernel(%arg0: i32, %arg1: memref<64x128xf32, #tpu.memory_space<vmem>>, %arg2: memref<1x128xf32, #tpu.memory_space<vmem>>, %arg3: memref<64x128xf32, #tpu.memory_space<vmem>>) attributes {dimension_semantics = [#tpu.dimension_semantics<parallel>], iteration_bounds = array<i64: 8>, scalar_prefetch = 0 : i64, scratch_operands = 0 : i64, tpu.core_type = #tpu.core_type<tc>, window_params = [{transform_indices = @transform_0, window_bounds = array<i64: 64, 128>}, {pipeline_mode = #tpu.pipeline_mode<synchronous>, transform_indices = @transform_1, window_bounds = array<i64: 1, 128>}, {transform_indices = @transform_2, window_bounds = array<i64: 64, 128>}]} {
    %c0 = arith.constant 0 : index
    %c0_0 = arith.constant 0 : index
    %0 = vector.load %arg1[%c0, %c0_0] : memref<64x128xf32, #tpu.memory_space<vmem>>, vector<64x128xf32>
    %cst = arith.constant dense<0.000000e+00> : vector<64xf32>
    %1 = vector.multi_reduction <add>, %0, %cst [1] : vector<64x128xf32> to vector<64xf32>
    %2 = vector.shape_cast %1 : vector<64xf32> to vector<64x1xf32>
    %cst_1 = arith.constant 1.280000e+02 : f32
    %3 = vector.broadcast %cst_1 : f32 to vector<64x1xf32>
    %4 = arith.divf %2, %3 : vector<64x1xf32>
    %5 = vector.broadcast %4 : vector<64x1xf32> to vector<64x128xf32>
    %6 = arith.subf %0, %5 : vector<64x128xf32>
    %7 = arith.mulf %6, %6 : vector<64x128xf32>
    %cst_2 = arith.constant dense<0.000000e+00> : vector<64xf32>
    %8 = vector.multi_reduction <add>, %7, %cst_2 [1] : vector<64x128xf32> to vector<64xf32>
    %9 = vector.shape_cast %8 : vector<64xf32> to vector<64x1xf32>
    %cst_3 = arith.constant 1.280000e+02 : f32
    %10 = vector.broadcast %cst_3 : f32 to vector<64x1xf32>
    %11 = arith.divf %9, %10 : vector<64x1xf32>
    %cst_4 = arith.constant 9.99999974E-6 : f32
    %12 = vector.broadcast %cst_4 : f32 to vector<64x1xf32>
    %13 = arith.addf %11, %12 : vector<64x1xf32>
    %14 = math.rsqrt %13 : vector<64x1xf32>
    %15 = vector.broadcast %14 : vector<64x1xf32> to vector<64x128xf32>
    %16 = arith.mulf %0, %15 : vector<64x128xf32>
    %c0_5 = arith.constant 0 : index
    %c0_6 = arith.constant 0 : index
    %17 = vector.load %arg2[%c0_5, %c0_6] : memref<1x128xf32, #tpu.memory_space<vmem>>, vector<1x128xf32>
    %18 = vector.broadcast %17 : vector<1x128xf32> to vector<64x128xf32>
    %19 = arith.mulf %16, %18 : vector<64x128xf32>
    %c0_7 = arith.constant 0 : index
    %c0_8 = arith.constant 0 : index
    %20 = vector.load %arg3[%c0_7, %c0_8] : memref<64x128xf32, #tpu.memory_space<vmem>>, vector<64x128xf32>
    tpu.vector_store %arg3[%c0_7, %c0_8], %19 {strides = array<i32>} : memref<64x128xf32, #tpu.memory_space<vmem>>, vector<64x128xf32>,
    return
  }
  func.func @transform_0(%arg0: i32) -> (i32, i32) {
    %c0_i32 = arith.constant 0 : i32
    %c0_i32_0 = arith.constant 0 : i32
    return %arg0, %c0_i32 : i32, i32
  }
  func.func @transform_1(%arg0: i32) -> (i32, i32) {
    %c0_i32 = arith.constant 0 : i32
    %c0_i32_0 = arith.constant 0 : i32
    %c0_i32_1 = arith.constant 0 : i32
    return %c0_i32, %c0_i32_0 : i32, i32
  }
  func.func @transform_2(%arg0: i32) -> (i32, i32) {
    %c0_i32 = arith.constant 0 : i32
    %c0_i32_0 = arith.constant 0 : i32
    return %arg0, %c0_i32 : i32, i32
  }
}

</mosaic_0001>

<llo_original>
// kernel: tpu_custom_call.1
$region0: #{tpu_custom_call.1}
  #allocation0 [shape = 'u32[]', space=smem, size = 0x4, offset = 0x4, fixed_abs, tag = 'smem constant byte address 0x4 - core index']
  #allocation1 [shape = 'u32[144,128]{1,0:T(1,128)}', space=vmem, size = 0x12000, scoped, tag = 'internal scratch']
  %s0 = inlined_call_operand.hbm [shape: f32[512,128], index: 0, kind: input, shape index: {}]
  %s1 = inlined_call_operand.vmem [shape: f32[1,128], index: 1, kind: input, shape index: {}]
  %s2 = inlined_call_operand.hbm [shape: f32[512,128], index: 2, kind: output, shape index: {}]
  %s3 = sld [smem:[#allocation0]]
  $region45: #{tpu_custom_call.1} parent=0
    _
  %s5 = ssub.s32 1, %s3
  %s6 = scalar_select 0, %s5, %s3
  $region1: #{tpu_custom_call.1} parent=0
    #allocation2 [shape = 'u8[65536]{0}', space=vmem, size = 0x10000, scoped, tag = 'input window, operand 0']
    #allocation3 [shape = 's32[2]{0}', space=sflag, size = 0x8, scoped, tag = 'scoped memory for tpu_custom_call.1']
    #allocation4 [shape = 's32[2]{0}', space=sflag, size = 0x8, scoped, tag = 'scoped memory for tpu_custom_call.1']
    #allocation5 [shape = 'u8[65536]{0}', space=vmem, size = 0x10000, scoped, tag = 'output window, operand 0']
    %7 = vsyncpa [#allocation3], 0
    %s8 = scalar_lea.sflag [#allocation3], 1
    %9 = vsyncpa %s8, 0
    %10 = vsyncpa [#allocation4], 0
    %s11 = scalar_lea.sflag [#allocation4], 1
    %12 = vsyncpa %s11, 0
    loop: start=0, step=1, limit=10
    $region2: #{tpu_custom_call.1} parent=1 // loop_pre_header
      _
    $region3: #{tpu_custom_call.1} parent=1 // loop_header
      %s14 = sphi 0, %s18
      %p15 = scmp.ge.s32.totalorder %s14, 10
      %s24 = sphi 0, %s26
      %s27 = sphi 0, %s24
      %s28 = sphi 0, %s27
      %s44 = sphi 0, %s28
      %s48 = sphi 0, %s48
      %s50 = sphi 0, %s48
      %s51 = sphi 0, %s50
      %s65 = sphi 0, %s51
      %s71 = sphi 0, %s73
      %s74 = sphi 0, %s71
      %s75 = sphi 0, %s74
      %s91 = sphi 0, %s75
    $region4: #{tpu_custom_call.1} parent=1 // loop_header_branch
      %17 = sbr.rel (%p15) target = $region8
    $region5: #{tpu_custom_call.1} parent=1 // loop_body
      %s19 = ssub.s32 %s14, 1
      %s20 = ssub.s32 %s14, 2
      %s21 = sadd.s32 %s14, 1
      %s22 = ssub.s32 %s14, %s21
      %p23 = scmp.eq.s32.totalorder %s22, 0
      %s25 = sadd.s32 %s24, 1
      %s26 = scalar_select %p23, %s24, %s25
      %p29 = pneg %p23
      %p30 = scmp.eq.s32.totalorder %s14, 7
      %p31 = por %p29, %p30
      %p32 = scmp.ne.s32.totalorder %s24, %s27
      %p33 = scmp.eq.s32.totalorder %s14, 0
      %p34 = por %p32, %p33
      %p35 = scmp.ne.s32.totalorder %s24, %s27
      %p36 = scmp.eq.s32.totalorder %s19, 7
      %p37 = por %p35, %p36
      %p38 = scmp.ne.s32.totalorder %s27, %s28
      %p39 = scmp.eq.s32.totalorder %s19, 0
      %p40 = por %p38, %p39
      %p41 = scmp.ne.s32.totalorder %s27, %s28
      %p42 = scmp.eq.s32.totalorder %s20, 7
      %p43 = por %p41, %p42
      %p45 = scmp.ne.s32.totalorder %s28, %s44
      %p46 = scmp.eq.s32.totalorder %s20, 0
      %p47 = por %p45, %p46
      %s49 = sadd.s32 %s48, 1
      %p52 = scmp.eq.s32.totalorder %s14, 7
      %p53 = scmp.ne.s32.totalorder %s48, %s50
      %p54 = scmp.eq.s32.totalorder %s14, 0
      %p55 = por %p53, %p54
      %p56 = scmp.ne.s32.totalorder %s48, %s50
      %p57 = scmp.eq.s32.totalorder %s19, 7
      %p58 = por %p56, %p57
      %p59 = scmp.ne.s32.totalorder %s50, %s51
      %p60 = scmp.eq.s32.totalorder %s19, 0
      %p61 = por %p59, %p60
      %p62 = scmp.ne.s32.totalorder %s50, %s51
      %p63 = scmp.eq.s32.totalorder %s20, 7
      %p64 = por %p62, %p63
      %p66 = scmp.ne.s32.totalorder %s51, %s65
      %p67 = scmp.eq.s32.totalorder %s20, 0
      %p68 = por %p66, %p67
      %s69 = ssub.s32 %s14, %s21
      %p70 = scmp.eq.s32.totalorder %s69, 0
      %s72 = sadd.s32 %s71, 1
      %s73 = scalar_select %p70, %s71, %s72
      %p76 = pneg %p70
      %p77 = scmp.eq.s32.totalorder %s14, 7
      %p78 = por %p76, %p77
      %p79 = scmp.ne.s32.totalorder %s71, %s74
      %p80 = scmp.eq.s32.totalorder %s14, 0
      %p81 = por %p79, %p80
      %p82 = scmp.ne.s32.totalorder %s71, %s74
      %p83 = scmp.eq.s32.totalorder %s19, 7
      %p84 = por %p82, %p83
      %p85 = scmp.ne.s32.totalorder %s74, %s75
      %p86 = scmp.eq.s32.totalorder %s19, 0
      %p87 = por %p85, %p86
      %p88 = scmp.ne.s32.totalorder %s74, %s75
      %p89 = scmp.eq.s32.totalorder %s20, 7
      %p90 = por %p88, %p89
      %p92 = scmp.ne.s32.totalorder %s75, %s91
      %p93 = scmp.eq.s32.totalorder %s20, 0
      %p94 = por %p92, %p93
      %p95 = scmp.le.s32.totalorder 1, %s14
      %p96 = scmp.lt.s32.totalorder %s14, 9
      %p97 = pnand %p95, %p96
      %p98 = pneg %p97
      // Predicated region
      $region9: #{tpu_custom_call.1} parent=5 // pred_check
        _
      $region10: #{tpu_custom_call.1} parent=5 // pred_check_branch
        %100 = sbr.rel (%p97) target = $region12
      $region11: #{tpu_custom_call.1} parent=5 // pred_region
        %s101 = ssub.s32 %s14, 1
        // Predicated region
        $region13: #{tpu_custom_call.1} parent=11 // pred_check
          %p102 = pneg %p61
        $region14: #{tpu_custom_call.1} parent=11 // pred_check_branch
          %104 = sbr.rel (%p102) target = $region16
        $region15: #{tpu_custom_call.1} parent=11 // pred_region
          _
        $region16: #{tpu_custom_call.1} parent=11 // pred_fallthru
          _
      $region12: #{tpu_custom_call.1} parent=5 // pred_fallthru
        _
      %p105 = scmp.lt.s32.totalorder %s14, 8
      // Predicated region
      $region17: #{tpu_custom_call.1} parent=5 // pred_check
        %p106 = pneg %p105
      $region18: #{tpu_custom_call.1} parent=5 // pred_check_branch
        %108 = sbr.rel (%p106) target = $region20
      $region19: #{tpu_custom_call.1} parent=5 // pred_region
        // Predicated region
        $region21: #{tpu_custom_call.1} parent=19 // pred_check
          %p109 = pneg %p34
        $region22: #{tpu_custom_call.1} parent=19 // pred_check_branch
          %111 = sbr.rel (%p109) target = $region24
        $region23: #{tpu_custom_call.1} parent=19 // pred_region
          %s112 = sand.u32 %s24, 1
          %s113 = scalar_lea.sflag [#allocation3], %s112
          %s114 = sand.u32 %s24, 1
          %s115 = smul.addr %s114, 64
          %s116 = scalar_lea.vmem [#allocation2], %s115
          %s117 = smul.u32 8, %s14
          %s119 = ssub.s32 1024, 1024
          %120 = vsyncadd %s113, %s119
          %s121 = smul.addr %s117, 128
          %s122 = scalar_lea.hbm %s0, %s121
          %s123 = sshll.u32 %s116, 4
          %s124 = int_to_ptr.vmem [resolvable:$true] %s123
          %129 = dma.hbm_to_vmem [thread:$0]  %s122, 1024, %s124, %s113, 128, 128, 8
        $region24: #{tpu_custom_call.1} parent=19 // pred_fallthru
          _
      $region20: #{tpu_custom_call.1} parent=5 // pred_fallthru
        _
      %p130 = scmp.le.s32.totalorder 1, %s14
      %p131 = scmp.lt.s32.totalorder %s14, 9
      %p132 = pnand %p130, %p131
      %p133 = pneg %p132
      // Predicated region
      $region25: #{tpu_custom_call.1} parent=5 // pred_check
        _
      $region26: #{tpu_custom_call.1} parent=5 // pred_check_branch
        %135 = sbr.rel (%p132) target = $region28
      $region27: #{tpu_custom_call.1} parent=5 // pred_region
        %s136 = ssub.s32 %s14, 1
        %s137 = sand.u32 %s27, 1
        %s138 = scalar_lea.sflag [#allocation3], %s137
        %s139 = sand.u32 %s27, 1
        %s140 = smul.addr %s139, 64
        %s141 = scalar_lea.vmem [#allocation2], %s140
        // Predicated region
        $region29: #{tpu_custom_call.1} parent=27 // pred_check
          %p142 = pneg %p40
        $region30: #{tpu_custom_call.1} parent=27 // pred_check_branch
          %144 = sbr.rel (%p142) target = $region32
        $region31: #{tpu_custom_call.1} parent=27 // pred_region
          %145 = dma.done %s138, 1024
        $region32: #{tpu_custom_call.1} parent=27 // pred_fallthru
          _
        %s146 = sand.u32 %s27, 1
        %s147 = scalar_lea.sflag [#allocation3], %s146
        %s148 = sand.u32 %s27, 1
        %s149 = smul.addr %s148, 64
        %s150 = scalar_lea.vmem [#allocation2], %s149
        %p151 = pneg %p40
        %p152 = pneg %p37
        %p153 = pneg %p61
        %p154 = pneg %p58
        %p155 = pneg %p87
        %p156 = pneg %p84
        %s157 = sand.u32 %s74, 1
        %s158 = scalar_lea.sflag [#allocation4], %s157
        %s159 = sand.u32 %s74, 1
        %s160 = smul.addr %s159, 64
        %s161 = scalar_lea.vmem [#allocation5], %s160
        %s162 = smul.u32 8, %s19
        %s163 = smul.u32 8, %s19
        %v164 = vld [vmem:[%s141] sm:$0xff]
        %v165 = vld [vmem:[%s141 + $0x8] sm:$0xff]
        %v166 = vld [vmem:[%s141 + $0x10] sm:$0xff]
        %v167 = vld [vmem:[%s141 + $0x18] sm:$0xff]
        %v168 = vld [vmem:[%s141 + $0x20] sm:$0xff]
        %v169 = vld [vmem:[%s141 + $0x28] sm:$0xff]
        %v170 = vld [vmem:[%s141 + $0x30] sm:$0xff]
        %v171 = vld [vmem:[%s141 + $0x38] sm:$0xff]
        %172 = vadd.xlane.f32.xlu0 %v164
        %v173 = vpop.xlane.xlu0 %172
        %174 = vadd.xlane.f32.xlu0 %v165
        %v175 = vpop.xlane.xlu0 %174
        %176 = vadd.xlane.f32.xlu0 %v166
        %v177 = vpop.xlane.xlu0 %176
        %178 = vadd.xlane.f32.xlu0 %v167
        %v179 = vpop.xlane.xlu0 %178
        %180 = vadd.xlane.f32.xlu0 %v168
        %v181 = vpop.xlane.xlu0 %180
        %182 = vadd.xlane.f32.xlu0 %v169
        %v183 = vpop.xlane.xlu0 %182
        %184 = vadd.xlane.f32.xlu0 %v170
        %v185 = vpop.xlane.xlu0 %184
        %186 = vadd.xlane.f32.xlu0 %v171
        %v187 = vpop.xlane.xlu0 %186
        %v188 = vrcp.pop 128.0
        %v189 = vmul.f32 %v173, %v188
        %v190 = vmul.f32 %v175, %v188
        %v191 = vmul.f32 %v177, %v188
        %v192 = vmul.f32 %v179, %v188
        %v193 = vmul.f32 %v181, %v188
        %v194 = vmul.f32 %v183, %v188
        %v195 = vmul.f32 %v185, %v188
        %v196 = vmul.f32 %v187, %v188
        %v197 = vsub.f32 %v164, %v189
        %v198 = vsub.f32 %v165, %v190
        %v199 = vsub.f32 %v166, %v191
        %v200 = vsub.f32 %v167, %v192
        %v201 = vsub.f32 %v168, %v193
        %v202 = vsub.f32 %v169, %v194
        %v203 = vsub.f32 %v170, %v195
        %v204 = vsub.f32 %v171, %v196
        %v205 = vmul.f32 %v197, %v197
        %v206 = vmul.f32 %v198, %v198
        %v207 = vmul.f32 %v199, %v199
        %v208 = vmul.f32 %v200, %v200
        %v209 = vmul.f32 %v201, %v201
        %v210 = vmul.f32 %v202, %v202
        %v211 = vmul.f32 %v203, %v203
        %v212 = vmul.f32 %v204, %v204
        %213 = vadd.xlane.f32.xlu0 %v205
        %v214 = vpop.xlane.xlu0 %213
        %215 = vadd.xlane.f32.xlu0 %v206
        %v216 = vpop.xlane.xlu0 %215
        %217 = vadd.xlane.f32.xlu0 %v207
        %v218 = vpop.xlane.xlu0 %217
        %219 = vadd.xlane.f32.xlu0 %v208
        %v220 = vpop.xlane.xlu0 %219
        %221 = vadd.xlane.f32.xlu0 %v209
        %v222 = vpop.xlane.xlu0 %221
        %223 = vadd.xlane.f32.xlu0 %v210
        %v224 = vpop.xlane.xlu0 %223
        %225 = vadd.xlane.f32.xlu0 %v211
        %v226 = vpop.xlane.xlu0 %225
        %227 = vadd.xlane.f32.xlu0 %v212
        %v228 = vpop.xlane.xlu0 %227
        %v229 = vmul.f32 %v214, %v188
        %v230 = vmul.f32 %v216, %v188
        %v231 = vmul.f32 %v218, %v188
        %v232 = vmul.f32 %v220, %v188
        %v233 = vmul.f32 %v222, %v188
        %v234 = vmul.f32 %v224, %v188
        %v235 = vmul.f32 %v226, %v188
        %v236 = vmul.f32 %v228, %v188
        %v237 = vadd.f32 %v229, 1e-05
        %v238 = vadd.f32 %v230, 1e-05
        %v239 = vadd.f32 %v231, 1e-05
        %v240 = vadd.f32 %v232, 1e-05
        %v241 = vadd.f32 %v233, 1e-05
        %v242 = vadd.f32 %v234, 1e-05
        %v243 = vadd.f32 %v235, 1e-05
        %v244 = vadd.f32 %v236, 1e-05
        %v245 = vrsqrt.pop %v237
        %v246 = vrsqrt.pop %v238
        %v247 = vrsqrt.pop %v239
        %v248 = vrsqrt.pop %v240
        %v249 = vrsqrt.pop %v241
        %v250 = vrsqrt.pop %v242
        %v251 = vrsqrt.pop %v243
        %v252 = vrsqrt.pop %v244
        %v253 = vmul.f32 %v164, %v245
        %v254 = vmul.f32 %v165, %v246
        %v255 = vmul.f32 %v166, %v247
        %v256 = vmul.f32 %v167, %v248
        %v257 = vmul.f32 %v168, %v249
        %v258 = vmul.f32 %v169, %v250
        %v259 = vmul.f32 %v170, %v251
        %v260 = vmul.f32 %v171, %v252
        %v261 = vld [vmem:[%s1] sm:$0x1]
        %v263 = vlaneseq
        %v264 = vshrl.u32 %v263, 7
        %v265 = vsub.s32 0, %v264
        %v266 = vrot.slane %v261, %v265
        %v268 = vmul.f32 %v253, %v266
        %v269 = vmul.f32 %v254, %v266
        %v270 = vmul.f32 %v255, %v266
        %v271 = vmul.f32 %v256, %v266
        %v272 = vmul.f32 %v257, %v266
        %v273 = vmul.f32 %v258, %v266
        %v274 = vmul.f32 %v259, %v266
        %v275 = vmul.f32 %v260, %v266
        %276 = vst [vmem:[%s161] sm:$0xff] %v268
        %277 = vst [vmem:[%s161 + $0x8] sm:$0xff] %v269
        %278 = vst [vmem:[%s161 + $0x10] sm:$0xff] %v270
        %279 = vst [vmem:[%s161 + $0x18] sm:$0xff] %v271
        %280 = vst [vmem:[%s161 + $0x20] sm:$0xff] %v272
        %281 = vst [vmem:[%s161 + $0x28] sm:$0xff] %v273
        %282 = vst [vmem:[%s161 + $0x30] sm:$0xff] %v274
        %283 = vst [vmem:[%s161 + $0x38] sm:$0xff] %v275
        %s284 = sand.u32 %s74, 1
        %s285 = scalar_lea.sflag [#allocation4], %s284
        %s286 = sand.u32 %s74, 1
        %s287 = smul.addr %s286, 64
        %s288 = scalar_lea.vmem [#allocation5], %s287
        // Predicated region
        $region33: #{tpu_custom_call.1} parent=27 // pred_check
          %p289 = pneg %p84
        $region34: #{tpu_custom_call.1} parent=27 // pred_check_branch
          %291 = sbr.rel (%p289) target = $region36
        $region35: #{tpu_custom_call.1} parent=27 // pred_region
          %s292 = smul.u32 8, %s19
          %s294 = ssub.s32 1024, 1024
          %295 = vsyncadd %s285, %s294
          %s296 = smul.addr %s292, 128
          %s297 = scalar_lea.hbm %s2, %s296
          %s298 = sshll.u32 %s288, 4
          %s299 = int_to_ptr.vmem [resolvable:$true] %s298
          %304 = dma.vmem_to_hbm [thread:$0]  %s299, 1024, %s297, %s285, 128, 128, 8
        $region36: #{tpu_custom_call.1} parent=27 // pred_fallthru
          _
      $region28: #{tpu_custom_call.1} parent=5 // pred_fallthru
        _
      %p305 = scmp.le.s32.totalorder 2, %s14
      // Predicated region
      $region37: #{tpu_custom_call.1} parent=5 // pred_check
        %p306 = pneg %p305
      $region38: #{tpu_custom_call.1} parent=5 // pred_check_branch
        %308 = sbr.rel (%p306) target = $region40
      $region39: #{tpu_custom_call.1} parent=5 // pred_region
        %s309 = ssub.s32 %s14, 2
        // Predicated region
        $region41: #{tpu_custom_call.1} parent=39 // pred_check
          %p310 = pneg %p90
        $region42: #{tpu_custom_call.1} parent=39 // pred_check_branch
          %312 = sbr.rel (%p310) target = $region44
        $region43: #{tpu_custom_call.1} parent=39 // pred_region
          %s313 = sand.u32 %s75, 1
          %s314 = scalar_lea.sflag [#allocation4], %s313
          %s315 = sand.u32 %s75, 1
          %s316 = smul.addr %s315, 64
          %s317 = scalar_lea.vmem [#allocation5], %s316
          %318 = dma.done %s314, 1024
        $region44: #{tpu_custom_call.1} parent=39 // pred_fallthru
          _
      $region40: #{tpu_custom_call.1} parent=5 // pred_fallthru
        _
    $region6: #{tpu_custom_call.1} parent=1 // loop_footer
      %s18 = sadd.s32 1, %s14
    $region7: #{tpu_custom_call.1} parent=1 // loop_footer_branch
      %13 = sbr.rel target = $region3
    $region8: #{tpu_custom_call.1} parent=1 // loop_exit
      _
    %319 = vsyncpa [#allocation3], 1
    %s320 = scalar_lea.sflag [#allocation3], 1
    %321 = vsyncpa %s320, 1
    %322 = vsyncpa [#allocation4], 1
    %s323 = scalar_lea.sflag [#allocation4], 1
    %324 = vsyncpa %s323, 1

</llo_original>
